<compile_context>
chip_gen: v6e
topology: v6e:2x2x1
jax: 0.10.0
libtpu: 0.0.40
codegen_flags: <defaults>
</compile_context>

<pallas_src>
import functools

import jax
import jax.numpy as jnp
import numpy as np
from jax.experimental import pallas as pl
from jax.experimental.pallas import tpu as pltpu

# --- synthetic hyper-parameters (small, deterministic) -----------------------
LATENT_VECTOR_SIZE = 16   # only used by hidden_initiation_linear (unused in forward)
HIDDEN_SIZE = 32
MAX_STROKES = 8           # == batch dim the LSTM sees (inputs dim 1)
DROPOUT = 0.1             # inference -> identity
SEQ_LEN = 6               # x.size(0) -> LSTM time dimension
NOUT_PAD = 128            # lane-padded width of the output linear head


# --- Pallas kernel -----------------------------------------------------------
def sketch_decoder_kernel(T, B, x_ref, wih_ref, whh_ref, b_ref, wlin_ref,
                          blin_ref, h0_ref, c0_ref, out_ref, hT_ref, cT_ref):
    """Fused LSTM-over-T + output linear + head, one invocation."""
    H = whh_ref.shape[0]

    # Input path has no sequential dependence: one (T*B,5)x(5,4H) MXU call,
    # with the pre-fused (b_ih + b_hh) bias.
    xg = (jnp.dot(x_ref[...], wih_ref[...], preferred_element_type=jnp.float32)
          + b_ref[...])                                          # (T*B, 4H)

    whh = whh_ref[...]
    h = h0_ref[...]                                              # (B, H)
    c = c0_ref[...]                                              # (B, H)
    hs = []
    # Tiny static trip count -> fully unrolled recurrence; only h @ W_hh and
    # the gate nonlinearities sit on the sequential critical path.
    for t in range(T):
        gates = (xg[t * B:(t + 1) * B, :]
                 + jnp.dot(h, whh, preferred_element_type=jnp.float32))
        # PyTorch LSTM gate layout: [i, f, g, o] along the 4H axis.
        i_g = jax.nn.sigmoid(gates[:, 0:H])
        f_g = jax.nn.sigmoid(gates[:, H:2 * H])
        g_g = jnp.tanh(gates[:, 2 * H:3 * H])
        o_g = jax.nn.sigmoid(gates[:, 3 * H:4 * H])
        c = f_g * c + i_g * g_g
        h = o_g * jnp.tanh(c)
        hs.append(h)

    # Final hidden/cell state, written exactly once.
    hT_ref[...] = h
    cT_ref[...] = c

    # Output projection (nn.Linear(H, 7), lane-padded to 128 cols) for all T
    # time steps in one MXU call.
    h_all = jnp.concatenate(hs, axis=0)                          # (T*B, H)
    y = (jnp.dot(h_all, wlin_ref[...], preferred_element_type=jnp.float32)
         + blin_ref[...])                                        # (T*B, NOUT)
    NOUT = y.shape[1]

    # Fused head: sigma = exp(param/2) on channels 1,3; softmax over *time*
    # (dim 0, exactly like torch.softmax(pen_state_logits, dim=0)) on ch >= 4.
    y_t = [y[t * B:(t + 1) * B, :] for t in range(T)]            # T x (B, NOUT)
    m = y_t[0]
    for t in range(1, T):
        m = jnp.maximum(m, y_t[t])
    e_t = [jnp.exp(yt - m) for yt in y_t]
    denom = e_t[0]
    for t in range(1, T):
        denom = denom + e_t[t]
    inv = 1.0 / denom                                            # exact recip

    ch = jax.lax.broadcasted_iota(jnp.int32, (B, NOUT), 1)
    is_sigma = (ch == 1) | (ch == 3)                             # sigma_x, sigma_y
    is_pen = ch >= 4                                             # pen-state channels
    outs = []
    for t in range(T):
        outs.append(jnp.where(is_pen, e_t[t] * inv,
                              jnp.where(is_sigma, jnp.exp(y_t[t] * 0.5),
                                        y_t[t])))
    # One lane-dense store of the whole (T*B, 128) result.
    out_ref[...] = jnp.concatenate(outs, axis=0)


# --- wrapper -----------------------------------------------------------------
def sketch_decoder_forward(x, params, hidden_cell=None):
    """x: (T, B, 5) float32 where B == MAX_STROKES. Returns (output, (h, c))."""
    T, B, _ = x.shape
    H = params["w_hh_t"].shape[0]

    # start-of-sequence token + shift (plain-JAX glue, same as the torch code)
    sos = jnp.zeros((T, 1, 5), jnp.float32).at[:, :, 2].set(1.0)
    inputs = jnp.concatenate([sos, x[:, :-1, :]], axis=1)        # (T, B, 5)
    inputs_flat = inputs.reshape(T * B, 5)                       # row t -> rows t*B:(t+1)*B

    if hidden_cell is None:
        h0 = jnp.zeros((B, H), jnp.float32)
        c0 = jnp.zeros((B, H), jnp.float32)
    else:
        h0 = hidden_cell[0].reshape(B, H)
        c0 = hidden_cell[1].reshape(B, H)

    bias = params["b_ih"] + params["b_hh"]                       # fused LSTM bias (1, 4H)
    w_lin_pad = jnp.zeros((H, NOUT_PAD), jnp.float32).at[:, :7].set(params["w_lin_t"])
    b_lin_pad = jnp.zeros((1, NOUT_PAD), jnp.float32).at[:, :7].set(params["b_lin"])

    vmem = pl.BlockSpec(memory_space=pltpu.MemorySpace.VMEM)
    y_flat, hT, cT = pl.pallas_call(
        functools.partial(sketch_decoder_kernel, T, B),
        out_shape=(jax.ShapeDtypeStruct((T * B, NOUT_PAD), jnp.float32),
                   jax.ShapeDtypeStruct((B, H), jnp.float32),
                   jax.ShapeDtypeStruct((B, H), jnp.float32)),
        in_specs=[vmem] * 8,
        out_specs=(vmem, vmem, vmem),
    )(inputs_flat, params["w_ih_t"], params["w_hh_t"], bias,
      w_lin_pad, b_lin_pad, h0, c0)

    out = y_flat[:, :7].reshape(T, B, 7)                         # drop lane padding
    return out, (hT.reshape(1, B, H), cT.reshape(1, B, H))


# --- deterministic parameter init (mimics nn.LSTM / nn.Linear shapes) --------
def init_params(key, H):
    ks = jax.random.split(key, 6)
    s = 1.0 / np.sqrt(H)
    w_ih = jax.random.uniform(ks[0], (4 * H, 5), jnp.float32, -s, s)
    w_hh = jax.random.uniform(ks[1], (4 * H, H), jnp.float32, -s, s)
    b_ih = jax.random.uniform(ks[2], (4 * H,), jnp.float32, -s, s)
    b_hh = jax.random.uniform(ks[3], (4 * H,), jnp.float32, -s, s)
    w_lin = jax.random.uniform(ks[4], (7, H), jnp.float32, -s, s)
    b_lin = jax.random.uniform(ks[5], (7,), jnp.float32, -s, s)
    return {
        "w_ih_t": w_ih.T, "w_hh_t": w_hh.T,
        "b_ih": b_ih.reshape(1, -1), "b_hh": b_hh.reshape(1, -1),
        "w_lin_t": w_lin.T, "b_lin": b_lin.reshape(1, -1),
    }


# --- pure-JAX reference for verification -------------------------------------
def reference_forward(x, params):
    T, B, _ = x.shape
    H = params["w_hh_t"].shape[0]
    sos = jnp.zeros((T, 1, 5), jnp.float32).at[:, :, 2].set(1.0)
    inputs = jnp.concatenate([sos, x[:, :-1, :]], axis=1)
    h = jnp.zeros((B, H), jnp.float32)
    c = jnp.zeros((B, H), jnp.float32)
    ys = []
    for t in range(T):
        gates = (inputs[t] @ params["w_ih_t"] + h @ params["w_hh_t"]
                 + params["b_ih"] + params["b_hh"])
        i = jax.nn.sigmoid(gates[:, :H])
        f = jax.nn.sigmoid(gates[:, H:2 * H])
        g = jnp.tanh(gates[:, 2 * H:3 * H])
        o = jax.nn.sigmoid(gates[:, 3 * H:])
        c = f * c + i * g
        h = o * jnp.tanh(c)
        ys.append(h @ params["w_lin_t"] + params["b_lin"])
    y = jnp.stack(ys)                                            # (T, B, 7)
    gp, logits = y[:, :, :4], y[:, :, 4:]
    pen = jax.nn.softmax(logits, axis=0)                         # dim=0, like torch code
    out = jnp.stack([gp[:, :, 0], jnp.exp(gp[:, :, 1] / 2),
                     gp[:, :, 2], jnp.exp(gp[:, :, 3] / 2)], axis=-1)
    out = jnp.concatenate([out, pen], axis=-1)
    return out, (h.reshape(1, B, H), c.reshape(1, B, H))


if __name__ == "__main__":
    key = jax.random.PRNGKey(0)
    pkey, xkey = jax.random.split(key)
    params = init_params(pkey, HIDDEN_SIZE)
    x = jax.random.normal(xkey, (SEQ_LEN, MAX_STROKES, 5), jnp.float32)

    fwd = jax.jit(sketch_decoder_forward)
    out, (h, c) = fwd(x, params)
    jax.block_until_ready((out, h, c))

    ref_out, (ref_h, ref_c) = reference_forward(x, params)
    assert out.shape == (SEQ_LEN, MAX_STROKES, 7)
    assert h.shape == (1, MAX_STROKES, HIDDEN_SIZE)
    assert c.shape == (1, MAX_STROKES, HIDDEN_SIZE)
    np.testing.assert_allclose(np.asarray(out), np.asarray(ref_out),
                               atol=1e-5, rtol=1e-5)
    np.testing.assert_allclose(np.asarray(h), np.asarray(ref_h),
                               atol=1e-5, rtol=1e-5)
    np.testing.assert_allclose(np.asarray(c), np.asarray(ref_c),
                               atol=1e-5, rtol=1e-5)
    print("KERNEL_OK")
</pallas_src>

<mosaic_0001>
module attributes {stable_mosaic.version = 11 : i64} {
  func.func @sketch_decoder_kernel(%arg0: memref<48x5xf32, #tpu.memory_space<vmem>>, %arg1: memref<5x128xf32, #tpu.memory_space<vmem>>, %arg2: memref<32x128xf32, #tpu.memory_space<vmem>>, %arg3: memref<1x128xf32, #tpu.memory_space<vmem>>, %arg4: memref<32x128xf32, #tpu.memory_space<vmem>>, %arg5: memref<1x128xf32, #tpu.memory_space<vmem>>, %arg6: memref<8x32xf32, #tpu.memory_space<vmem>>, %arg7: memref<8x32xf32, #tpu.memory_space<vmem>>, %arg8: memref<48x128xf32, #tpu.memory_space<vmem>>, %arg9: memref<8x32xf32, #tpu.memory_space<vmem>>, %arg10: memref<8x32xf32, #tpu.memory_space<vmem>>) attributes {dimension_semantics = [], scalar_prefetch = 0 : i64, scratch_operands = 0 : i64, tpu.core_type = #tpu.core_type<tc>} {
    %c0 = arith.constant 0 : index
    %c0_0 = arith.constant 0 : index
    %0 = vector.load %arg0[%c0, %c0_0] : memref<48x5xf32, #tpu.memory_space<vmem>>, vector<48x5xf32>
    %c0_1 = arith.constant 0 : index
    %c0_2 = arith.constant 0 : index
    %1 = vector.load %arg1[%c0_1, %c0_2] : memref<5x128xf32, #tpu.memory_space<vmem>>, vector<5x128xf32>
    %cst = arith.constant dense<0.000000e+00> : vector<48x128xf32>
    %2 = tpu.matmul %0, %1, %cst {dimension_numbers = #tpu.dot_dimension_numbers<[1], [0], [0], [1], [0, 0, 1, 1], [], []>} : vector<48x5xf32>, vector<5x128xf32>, vector<48x128xf32> -> vector<48x128xf32>
    %c0_3 = arith.constant 0 : index
    %c0_4 = arith.constant 0 : index
    %3 = vector.load %arg3[%c0_3, %c0_4] : memref<1x128xf32, #tpu.memory_space<vmem>>, vector<1x128xf32>
    %4 = vector.broadcast %3 : vector<1x128xf32> to vector<48x128xf32>
    %5 = arith.addf %2, %4 : vector<48x128xf32>
    %c0_5 = arith.constant 0 : index
    %c0_6 = arith.constant 0 : index
    %6 = vector.load %arg2[%c0_5, %c0_6] : memref<32x128xf32, #tpu.memory_space<vmem>>, vector<32x128xf32>
    %c0_7 = arith.constant 0 : index
    %c0_8 = arith.constant 0 : index
    %7 = vector.load %arg6[%c0_7, %c0_8] : memref<8x32xf32, #tpu.memory_space<vmem>>, vector<8x32xf32>
    %c0_9 = arith.constant 0 : index
    %c0_10 = arith.constant 0 : index
    %8 = vector.load %arg7[%c0_9, %c0_10] : memref<8x32xf32, #tpu.memory_space<vmem>>, vector<8x32xf32>
    %9 = vector.extract_strided_slice %5 {offsets = [0, 0], sizes = [8, 128], strides = [1, 1]} : vector<48x128xf32> to vector<8x128xf32>
    %cst_11 = arith.constant dense<0.000000e+00> : vector<8x128xf32>
    %10 = tpu.matmul %7, %6, %cst_11 {dimension_numbers = #tpu.dot_dimension_numbers<[1], [0], [0], [1], [0, 0, 1, 1], [], []>} : vector<8x32xf32>, vector<32x128xf32>, vector<8x128xf32> -> vector<8x128xf32>
    %11 = arith.addf %9, %10 : vector<8x128xf32>
    %12 = vector.extract_strided_slice %11 {offsets = [0, 0], sizes = [8, 32], strides = [1, 1]} : vector<8x128xf32> to vector<8x32xf32>
    %13 = arith.negf %12 : vector<8x32xf32>
    %14 = math.exp %13 : vector<8x32xf32>
    %cst_12 = arith.constant 1.000000e+00 : f32
    %15 = vector.broadcast %cst_12 : f32 to vector<8x32xf32>
    %16 = arith.addf %15, %14 : vector<8x32xf32>
    %17 = arith.divf %15, %16 : vector<8x32xf32>
    %18 = vector.extract_strided_slice %11 {offsets = [0, 32], sizes = [8, 32], strides = [1, 1]} : vector<8x128xf32> to vector<8x32xf32>
    %19 = arith.negf %18 : vector<8x32xf32>
    %20 = math.exp %19 : vector<8x32xf32>
    %cst_13 = arith.constant 1.000000e+00 : f32
    %21 = vector.broadcast %cst_13 : f32 to vector<8x32xf32>
    %22 = arith.addf %21, %20 : vector<8x32xf32>
    %23 = arith.divf %21, %22 : vector<8x32xf32>
    %24 = vector.extract_strided_slice %11 {offsets = [0, 64], sizes = [8, 32], strides = [1, 1]} : vector<8x128xf32> to vector<8x32xf32>
    %25 = math.tanh %24 : vector<8x32xf32>
    %26 = vector.extract_strided_slice %11 {offsets = [0, 96], sizes = [8, 32], strides = [1, 1]} : vector<8x128xf32> to vector<8x32xf32>
    %27 = arith.negf %26 : vector<8x32xf32>
    %28 = math.exp %27 : vector<8x32xf32>
    %cst_14 = arith.constant 1.000000e+00 : f32
    %29 = vector.broadcast %cst_14 : f32 to vector<8x32xf32>
    %30 = arith.addf %29, %28 : vector<8x32xf32>
    %31 = arith.divf %29, %30 : vector<8x32xf32>
    %32 = arith.mulf %23, %8 : vector<8x32xf32>
    %33 = arith.mulf %17, %25 : vector<8x32xf32>
    %34 = arith.addf %32, %33 : vector<8x32xf32>
    %35 = math.tanh %34 : vector<8x32xf32>
    %36 = arith.mulf %31, %35 : vector<8x32xf32>
    %37 = vector.extract_strided_slice %5 {offsets = [8, 0], sizes = [8, 128], strides = [1, 1]} : vector<48x128xf32> to vector<8x128xf32>
    %cst_15 = arith.constant dense<0.000000e+00> : vector<8x128xf32>
    %38 = tpu.matmul %36, %6, %cst_15 {dimension_numbers = #tpu.dot_dimension_numbers<[1], [0], [0], [1], [0, 0, 1, 1], [], []>} : vector<8x32xf32>, vector<32x128xf32>, vector<8x128xf32> -> vector<8x128xf32>
    %39 = arith.addf %37, %38 : vector<8x128xf32>
    %40 = vector.extract_strided_slice %39 {offsets = [0, 0], sizes = [8, 32], strides = [1, 1]} : vector<8x128xf32> to vector<8x32xf32>
    %41 = arith.negf %40 : vector<8x32xf32>
    %42 = math.exp %41 : vector<8x32xf32>
    %cst_16 = arith.constant 1.000000e+00 : f32
    %43 = vector.broadcast %cst_16 : f32 to vector<8x32xf32>
    %44 = arith.addf %43, %42 : vector<8x32xf32>
    %45 = arith.divf %43, %44 : vector<8x32xf32>
    %46 = vector.extract_strided_slice %39 {offsets = [0, 32], sizes = [8, 32], strides = [1, 1]} : vector<8x128xf32> to vector<8x32xf32>
    %47 = arith.negf %46 : vector<8x32xf32>
    %48 = math.exp %47 : vector<8x32xf32>
    %cst_17 = arith.constant 1.000000e+00 : f32
    %49 = vector.broadcast %cst_17 : f32 to vector<8x32xf32>
    %50 = arith.addf %49, %48 : vector<8x32xf32>
    %51 = arith.divf %49, %50 : vector<8x32xf32>
    %52 = vector.extract_strided_slice %39 {offsets = [0, 64], sizes = [8, 32], strides = [1, 1]} : vector<8x128xf32> to vector<8x32xf32>
    %53 = math.tanh %52 : vector<8x32xf32>
    %54 = vector.extract_strided_slice %39 {offsets = [0, 96], sizes = [8, 32], strides = [1, 1]} : vector<8x128xf32> to vector<8x32xf32>
    %55 = arith.negf %54 : vector<8x32xf32>
    %56 = math.exp %55 : vector<8x32xf32>
    %cst_18 = arith.constant 1.000000e+00 : f32
    %57 = vector.broadcast %cst_18 : f32 to vector<8x32xf32>
    %58 = arith.addf %57, %56 : vector<8x32xf32>
    %59 = arith.divf %57, %58 : vector<8x32xf32>
    %60 = arith.mulf %51, %34 : vector<8x32xf32>
    %61 = arith.mulf %45, %53 : vector<8x32xf32>
    %62 = arith.addf %60, %61 : vector<8x32xf32>
    %63 = math.tanh %62 : vector<8x32xf32>
    %64 = arith.mulf %59, %63 : vector<8x32xf32>
    %65 = vector.extract_strided_slice %5 {offsets = [16, 0], sizes = [8, 128], strides = [1, 1]} : vector<48x128xf32> to vector<8x128xf32>
    %cst_19 = arith.constant dense<0.000000e+00> : vector<8x128xf32>
    %66 = tpu.matmul %64, %6, %cst_19 {dimension_numbers = #tpu.dot_dimension_numbers<[1], [0], [0], [1], [0, 0, 1, 1], [], []>} : vector<8x32xf32>, vector<32x128xf32>, vector<8x128xf32> -> vector<8x128xf32>
    %67 = arith.addf %65, %66 : vector<8x128xf32>
    %68 = vector.extract_strided_slice %67 {offsets = [0, 0], sizes = [8, 32], strides = [1, 1]} : vector<8x128xf32> to vector<8x32xf32>
    %69 = arith.negf %68 : vector<8x32xf32>
    %70 = math.exp %69 : vector<8x32xf32>
    %cst_20 = arith.constant 1.000000e+00 : f32
    %71 = vector.broadcast %cst_20 : f32 to vector<8x32xf32>
    %72 = arith.addf %71, %70 : vector<8x32xf32>
    %73 = arith.divf %71, %72 : vector<8x32xf32>
    %74 = vector.extract_strided_slice %67 {offsets = [0, 32], sizes = [8, 32], strides = [1, 1]} : vector<8x128xf32> to vector<8x32xf32>
    %75 = arith.negf %74 : vector<8x32xf32>
    %76 = math.exp %75 : vector<8x32xf32>
    %cst_21 = arith.constant 1.000000e+00 : f32
    %77 = vector.broadcast %cst_21 : f32 to vector<8x32xf32>
    %78 = arith.addf %77, %76 : vector<8x32xf32>
    %79 = arith.divf %77, %78 : vector<8x32xf32>
    %80 = vector.extract_strided_slice %67 {offsets = [0, 64], sizes = [8, 32], strides = [1, 1]} : vector<8x128xf32> to vector<8x32xf32>
    %81 = math.tanh %80 : vector<8x32xf32>
    %82 = vector.extract_strided_slice %67 {offsets = [0, 96], sizes = [8, 32], strides = [1, 1]} : vector<8x128xf32> to vector<8x32xf32>
    %83 = arith.negf %82 : vector<8x32xf32>
    %84 = math.exp %83 : vector<8x32xf32>
    %cst_22 = arith.constant 1.000000e+00 : f32
    %85 = vector.broadcast %cst_22 : f32 to vector<8x32xf32>
    %86 = arith.addf %85, %84 : vector<8x32xf32>
    %87 = arith.divf %85, %86 : vector<8x32xf32>
    %88 = arith.mulf %79, %62 : vector<8x32xf32>
    %89 = arith.mulf %73, %81 : vector<8x32xf32>
    %90 = arith.addf %88, %89 : vector<8x32xf32>
    %91 = math.tanh %90 : vector<8x32xf32>
    %92 = arith.mulf %87, %91 : vector<8x32xf32>
    %93 = vector.extract_strided_slice %5 {offsets = [24, 0], sizes = [8, 128], strides = [1, 1]} : vector<48x128xf32> to vector<8x128xf32>
    %cst_23 = arith.constant dense<0.000000e+00> : vector<8x128xf32>
    %94 = tpu.matmul %92, %6, %cst_23 {dimension_numbers = #tpu.dot_dimension_numbers<[1], [0], [0], [1], [0, 0, 1, 1], [], []>} : vector<8x32xf32>, vector<32x128xf32>, vector<8x128xf32> -> vector<8x128xf32>
    %95 = arith.addf %93, %94 : vector<8x128xf32>
    %96 = vector.extract_strided_slice %95 {offsets = [0, 0], sizes = [8, 32], strides = [1, 1]} : vector<8x128xf32> to vector<8x32xf32>
    %97 = arith.negf %96 : vector<8x32xf32>
    %98 = math.exp %97 : vector<8x32xf32>
    %cst_24 = arith.constant 1.000000e+00 : f32
    %99 = vector.broadcast %cst_24 : f32 to vector<8x32xf32>
    %100 = arith.addf %99, %98 : vector<8x32xf32>
    %101 = arith.divf %99, %100 : vector<8x32xf32>
    %102 = vector.extract_strided_slice %95 {offsets = [0, 32], sizes = [8, 32], strides = [1, 1]} : vector<8x128xf32> to vector<8x32xf32>
    %103 = arith.negf %102 : vector<8x32xf32>
    %104 = math.exp %103 : vector<8x32xf32>
    %cst_25 = arith.constant 1.000000e+00 : f32
    %105 = vector.broadcast %cst_25 : f32 to vector<8x32xf32>
    %106 = arith.addf %105, %104 : vector<8x32xf32>
    %107 = arith.divf %105, %106 : vector<8x32xf32>
    %108 = vector.extract_strided_slice %95 {offsets = [0, 64], sizes = [8, 32], strides = [1, 1]} : vector<8x128xf32> to vector<8x32xf32>
    %109 = math.tanh %108 : vector<8x32xf32>
    %110 = vector.extract_strided_slice %95 {offsets = [0, 96], sizes = [8, 32], strides = [1, 1]} : vector<8x128xf32> to vector<8x32xf32>
    %111 = arith.negf %110 : vector<8x32xf32>
    %112 = math.exp %111 : vector<8x32xf32>
    %cst_26 = arith.constant 1.000000e+00 : f32
    %113 = vector.broadcast %cst_26 : f32 to vector<8x32xf32>
    %114 = arith.addf %113, %112 : vector<8x32xf32>
    %115 = arith.divf %113, %114 : vector<8x32xf32>
    %116 = arith.mulf %107, %90 : vector<8x32xf32>
    %117 = arith.mulf %101, %109 : vector<8x32xf32>
    %118 = arith.addf %116, %117 : vector<8x32xf32>
    %119 = math.tanh %118 : vector<8x32xf32>
    %120 = arith.mulf %115, %119 : vector<8x32xf32>
    %121 = vector.extract_strided_slice %5 {offsets = [32, 0], sizes = [8, 128], strides = [1, 1]} : vector<48x128xf32> to vector<8x128xf32>
    %cst_27 = arith.constant dense<0.000000e+00> : vector<8x128xf32>
    %122 = tpu.matmul %120, %6, %cst_27 {dimension_numbers = #tpu.dot_dimension_numbers<[1], [0], [0], [1], [0, 0, 1, 1], [], []>} : vector<8x32xf32>, vector<32x128xf32>, vector<8x128xf32> -> vector<8x128xf32>
    %123 = arith.addf %121, %122 : vector<8x128xf32>
    %124 = vector.extract_strided_slice %123 {offsets = [0, 0], sizes = [8, 32], strides = [1, 1]} : vector<8x128xf32> to vector<8x32xf32>
    %125 = arith.negf %124 : vector<8x32xf32>
    %126 = math.exp %125 : vector<8x32xf32>
    %cst_28 = arith.constant 1.000000e+00 : f32
    %127 = vector.broadcast %cst_28 : f32 to vector<8x32xf32>
    %128 = arith.addf %127, %126 : vector<8x32xf32>
    %129 = arith.divf %127, %128 : vector<8x32xf32>
    %130 = vector.extract_strided_slice %123 {offsets = [0, 32], sizes = [8, 32], strides = [1, 1]} : vector<8x128xf32> to vector<8x32xf32>
    %131 = arith.negf %130 : vector<8x32xf32>
    %132 = math.exp %131 : vector<8x32xf32>
    %cst_29 = arith.constant 1.000000e+00 : f32
    %133 = vector.broadcast %cst_29 : f32 to vector<8x32xf32>
    %134 = arith.addf %133, %132 : vector<8x32xf32>
    %135 = arith.divf %133, %134 : vector<8x32xf32>
    %136 = vector.extract_strided_slice %123 {offsets = [0, 64], sizes = [8, 32], strides = [1, 1]} : vector<8x128xf32> to vector<8x32xf32>
    %137 = math.tanh %136 : vector<8x32xf32>
    %138 = vector.extract_strided_slice %123 {offsets = [0, 96], sizes = [8, 32], strides = [1, 1]} : vector<8x128xf32> to vector<8x32xf32>
    %139 = arith.negf %138 : vector<8x32xf32>
    %140 = math.exp %139 : vector<8x32xf32>
    %cst_30 = arith.constant 1.000000e+00 : f32
    %141 = vector.broadcast %cst_30 : f32 to vector<8x32xf32>
    %142 = arith.addf %141, %140 : vector<8x32xf32>
    %143 = arith.divf %141, %142 : vector<8x32xf32>
    %144 = arith.mulf %135, %118 : vector<8x32xf32>
    %145 = arith.mulf %129, %137 : vector<8x32xf32>
    %146 = arith.addf %144, %145 : vector<8x32xf32>
    %147 = math.tanh %146 : vector<8x32xf32>
    %148 = arith.mulf %143, %147 : vector<8x32xf32>
    %149 = vector.extract_strided_slice %5 {offsets = [40, 0], sizes = [8, 128], strides = [1, 1]} : vector<48x128xf32> to vector<8x128xf32>
    %cst_31 = arith.constant dense<0.000000e+00> : vector<8x128xf32>
    %150 = tpu.matmul %148, %6, %cst_31 {dimension_numbers = #tpu.dot_dimension_numbers<[1], [0], [0], [1], [0, 0, 1, 1], [], []>} : vector<8x32xf32>, vector<32x128xf32>, vector<8x128xf32> -> vector<8x128xf32>
    %151 = arith.addf %149, %150 : vector<8x128xf32>
    %152 = vector.extract_strided_slice %151 {offsets = [0, 0], sizes = [8, 32], strides = [1, 1]} : vector<8x128xf32> to vector<8x32xf32>
    %153 = arith.negf %152 : vector<8x32xf32>
    %154 = math.exp %153 : vector<8x32xf32>
    %cst_32 = arith.constant 1.000000e+00 : f32
    %155 = vector.broadcast %cst_32 : f32 to vector<8x32xf32>
    %156 = arith.addf %155, %154 : vector<8x32xf32>
    %157 = arith.divf %155, %156 : vector<8x32xf32>
    %158 = vector.extract_strided_slice %151 {offsets = [0, 32], sizes = [8, 32], strides = [1, 1]} : vector<8x128xf32> to vector<8x32xf32>
    %159 = arith.negf %158 : vector<8x32xf32>
    %160 = math.exp %159 : vector<8x32xf32>
    %cst_33 = arith.constant 1.000000e+00 : f32
    %161 = vector.broadcast %cst_33 : f32 to vector<8x32xf32>
    %162 = arith.addf %161, %160 : vector<8x32xf32>
    %163 = arith.divf %161, %162 : vector<8x32xf32>
    %164 = vector.extract_strided_slice %151 {offsets = [0, 64], sizes = [8, 32], strides = [1, 1]} : vector<8x128xf32> to vector<8x32xf32>
    %165 = math.tanh %164 : vector<8x32xf32>
    %166 = vector.extract_strided_slice %151 {offsets = [0, 96], sizes = [8, 32], strides = [1, 1]} : vector<8x128xf32> to vector<8x32xf32>
    %167 = arith.negf %166 : vector<8x32xf32>
    %168 = math.exp %167 : vector<8x32xf32>
    %cst_34 = arith.constant 1.000000e+00 : f32
    %169 = vector.broadcast %cst_34 : f32 to vector<8x32xf32>
    %170 = arith.addf %169, %168 : vector<8x32xf32>
    %171 = arith.divf %169, %170 : vector<8x32xf32>
    %172 = arith.mulf %163, %146 : vector<8x32xf32>
    %173 = arith.mulf %157, %165 : vector<8x32xf32>
    %174 = arith.addf %172, %173 : vector<8x32xf32>
    %175 = math.tanh %174 : vector<8x32xf32>
    %176 = arith.mulf %171, %175 : vector<8x32xf32>
    %c0_35 = arith.constant 0 : index
    %c0_36 = arith.constant 0 : index
    %177 = vector.load %arg9[%c0_35, %c0_36] : memref<8x32xf32, #tpu.memory_space<vmem>>, vector<8x32xf32>
    tpu.vector_store %arg9[%c0_35, %c0_36], %176 {strides = array<i32>} : memref<8x32xf32, #tpu.memory_space<vmem>>, vector<8x32xf32>,
    %c0_37 = arith.constant 0 : index
    %c0_38 = arith.constant 0 : index
    %178 = vector.load %arg10[%c0_37, %c0_38] : memref<8x32xf32, #tpu.memory_space<vmem>>, vector<8x32xf32>
    tpu.vector_store %arg10[%c0_37, %c0_38], %174 {strides = array<i32>} : memref<8x32xf32, #tpu.memory_space<vmem>>, vector<8x32xf32>,
    %179 = tpu.concatenate %36, %64, %92, %120, %148, %176 in 0 : vector<8x32xf32>, vector<8x32xf32>, vector<8x32xf32>, vector<8x32xf32>, vector<8x32xf32>, vector<8x32xf32> -> vector<48x32xf32>
    %c0_39 = arith.constant 0 : index
    %c0_40 = arith.constant 0 : index
    %180 = vector.load %arg4[%c0_39, %c0_40] : memref<32x128xf32, #tpu.memory_space<vmem>>, vector<32x128xf32>
    %cst_41 = arith.constant dense<0.000000e+00> : vector<48x128xf32>
    %181 = tpu.matmul %179, %180, %cst_41 {dimension_numbers = #tpu.dot_dimension_numbers<[1], [0], [0], [1], [0, 0, 1, 1], [], []>} : vector<48x32xf32>, vector<32x128xf32>, vector<48x128xf32> -> vector<48x128xf32>
    %c0_42 = arith.constant 0 : index
    %c0_43 = arith.constant 0 : index
    %182 = vector.load %arg5[%c0_42, %c0_43] : memref<1x128xf32, #tpu.memory_space<vmem>>, vector<1x128xf32>
    %183 = vector.broadcast %182 : vector<1x128xf32> to vector<48x128xf32>
    %184 = arith.addf %181, %183 : vector<48x128xf32>
    %185 = vector.extract_strided_slice %184 {offsets = [0, 0], sizes = [8, 128], strides = [1, 1]} : vector<48x128xf32> to vector<8x128xf32>
    %186 = vector.extract_strided_slice %184 {offsets = [8, 0], sizes = [8, 128], strides = [1, 1]} : vector<48x128xf32> to vector<8x128xf32>
    %187 = vector.extract_strided_slice %184 {offsets = [16, 0], sizes = [8, 128], strides = [1, 1]} : vector<48x128xf32> to vector<8x128xf32>
    %188 = vector.extract_strided_slice %184 {offsets = [24, 0], sizes = [8, 128], strides = [1, 1]} : vector<48x128xf32> to vector<8x128xf32>
    %189 = vector.extract_strided_slice %184 {offsets = [32, 0], sizes = [8, 128], strides = [1, 1]} : vector<48x128xf32> to vector<8x128xf32>
    %190 = vector.extract_strided_slice %184 {offsets = [40, 0], sizes = [8, 128], strides = [1, 1]} : vector<48x128xf32> to vector<8x128xf32>
    %191 = arith.maximumf %185, %186 : vector<8x128xf32>
    %192 = arith.maximumf %191, %187 : vector<8x128xf32>
    %193 = arith.maximumf %192, %188 : vector<8x128xf32>
    %194 = arith.maximumf %193, %189 : vector<8x128xf32>
    %195 = arith.maximumf %194, %190 : vector<8x128xf32>
    %196 = arith.subf %185, %195 : vector<8x128xf32>
    %197 = math.exp %196 : vector<8x128xf32>
    %198 = arith.subf %186, %195 : vector<8x128xf32>
    %199 = math.exp %198 : vector<8x128xf32>
    %200 = arith.subf %187, %195 : vector<8x128xf32>
    %201 = math.exp %200 : vector<8x128xf32>
    %202 = arith.subf %188, %195 : vector<8x128xf32>
    %203 = math.exp %202 : vector<8x128xf32>
    %204 = arith.subf %189, %195 : vector<8x128xf32>
    %205 = math.exp %204 : vector<8x128xf32>
    %206 = arith.subf %190, %195 : vector<8x128xf32>
    %207 = math.exp %206 : vector<8x128xf32>
    %208 = arith.addf %197, %199 : vector<8x128xf32>
    %209 = arith.addf %208, %201 : vector<8x128xf32>
    %210 = arith.addf %209, %203 : vector<8x128xf32>
    %211 = arith.addf %210, %205 : vector<8x128xf32>
    %212 = arith.addf %211, %207 : vector<8x128xf32>
    %cst_44 = arith.constant 1.000000e+00 : f32
    %213 = vector.broadcast %cst_44 : f32 to vector<8x128xf32>
    %214 = arith.divf %213, %212 : vector<8x128xf32>
    %215 = tpu.iota {dimensions = array<i32: 1>} : vector<8x128xi32>
    %c1_i32 = arith.constant 1 : i32
    %216 = vector.broadcast %c1_i32 : i32 to vector<8x128xi32>
    %217 = arith.cmpi eq, %215, %216 : vector<8x128xi32>
    %c3_i32 = arith.constant 3 : i32
    %218 = vector.broadcast %c3_i32 : i32 to vector<8x128xi32>
    %219 = arith.cmpi eq, %215, %218 : vector<8x128xi32>
    %220 = arith.ori %217, %219 : vector<8x128xi1>
    %c4_i32 = arith.constant 4 : i32
    %221 = vector.broadcast %c4_i32 : i32 to vector<8x128xi32>
    %222 = arith.cmpi sge, %215, %221 : vector<8x128xi32>
    %223 = arith.mulf %197, %214 : vector<8x128xf32>
    %cst_45 = arith.constant 5.000000e-01 : f32
    %224 = vector.broadcast %cst_45 : f32 to vector<8x128xf32>
    %225 = arith.mulf %185, %224 : vector<8x128xf32>
    %226 = math.exp %225 : vector<8x128xf32>
    %227 = arith.select %220, %226, %185 : vector<8x128xi1>, vector<8x128xf32>
    %228 = arith.select %222, %223, %227 : vector<8x128xi1>, vector<8x128xf32>
    %229 = arith.mulf %199, %214 : vector<8x128xf32>
    %cst_46 = arith.constant 5.000000e-01 : f32
    %230 = vector.broadcast %cst_46 : f32 to vector<8x128xf32>
    %231 = arith.mulf %186, %230 : vector<8x128xf32>
    %232 = math.exp %231 : vector<8x128xf32>
    %233 = arith.select %220, %232, %186 : vector<8x128xi1>, vector<8x128xf32>
    %234 = arith.select %222, %229, %233 : vector<8x128xi1>, vector<8x128xf32>
    %235 = arith.mulf %201, %214 : vector<8x128xf32>
    %cst_47 = arith.constant 5.000000e-01 : f32
    %236 = vector.broadcast %cst_47 : f32 to vector<8x128xf32>
    %237 = arith.mulf %187, %236 : vector<8x128xf32>
    %238 = math.exp %237 : vector<8x128xf32>
    %239 = arith.select %220, %238, %187 : vector<8x128xi1>, vector<8x128xf32>
    %240 = arith.select %222, %235, %239 : vector<8x128xi1>, vector<8x128xf32>
    %241 = arith.mulf %203, %214 : vector<8x128xf32>
    %cst_48 = arith.constant 5.000000e-01 : f32
    %242 = vector.broadcast %cst_48 : f32 to vector<8x128xf32>
    %243 = arith.mulf %188, %242 : vector<8x128xf32>
    %244 = math.exp %243 : vector<8x128xf32>
    %245 = arith.select %220, %244, %188 : vector<8x128xi1>, vector<8x128xf32>
    %246 = arith.select %222, %241, %245 : vector<8x128xi1>, vector<8x128xf32>
    %247 = arith.mulf %205, %214 : vector<8x128xf32>
    %cst_49 = arith.constant 5.000000e-01 : f32
    %248 = vector.broadcast %cst_49 : f32 to vector<8x128xf32>
    %249 = arith.mulf %189, %248 : vector<8x128xf32>
    %250 = math.exp %249 : vector<8x128xf32>
    %251 = arith.select %220, %250, %189 : vector<8x128xi1>, vector<8x128xf32>
    %252 = arith.select %222, %247, %251 : vector<8x128xi1>, vector<8x128xf32>
    %253 = arith.mulf %207, %214 : vector<8x128xf32>
    %cst_50 = arith.constant 5.000000e-01 : f32
    %254 = vector.broadcast %cst_50 : f32 to vector<8x128xf32>
    %255 = arith.mulf %190, %254 : vector<8x128xf32>
    %256 = math.exp %255 : vector<8x128xf32>
    %257 = arith.select %220, %256, %190 : vector<8x128xi1>, vector<8x128xf32>
    %258 = arith.select %222, %253, %257 : vector<8x128xi1>, vector<8x128xf32>
    %259 = tpu.concatenate %228, %234, %240, %246, %252, %258 in 0 : vector<8x128xf32>, vector<8x128xf32>, vector<8x128xf32>, vector<8x128xf32>, vector<8x128xf32>, vector<8x128xf32> -> vector<48x128xf32>
    %c0_51 = arith.constant 0 : index
    %c0_52 = arith.constant 0 : index
    %260 = vector.load %arg8[%c0_51, %c0_52] : memref<48x128xf32, #tpu.memory_space<vmem>>, vector<48x128xf32>
    tpu.vector_store %arg8[%c0_51, %c0_52], %259 {strides = array<i32>} : memref<48x128xf32, #tpu.memory_space<vmem>>, vector<48x128xf32>,
    return
  }
}

</mosaic_0001>

<llo_original>
// kernel: sketch_decoder_forward.1
$region0: #{sketch_decoder_forward.1}
  #allocation0 [shape = 'u32[]', space=smem, size = 0x4, offset = 0x4, fixed_abs, tag = 'smem constant byte address 0x4 - core index']
  #allocation1 [shape = 'u32[144,128]{1,0:T(1,128)}', space=vmem, size = 0x12000, scoped, tag = 'internal scratch']
  %s0 = inlined_call_operand.vmem [shape: f32[48,5], index: 0, kind: input, shape index: {}]
  %s1 = inlined_call_operand.vmem [shape: f32[5,128], index: 1, kind: input, shape index: {}]
  %s2 = inlined_call_operand.vmem [shape: f32[32,128], index: 2, kind: input, shape index: {}]
  %s3 = inlined_call_operand.vmem [shape: f32[1,128], index: 3, kind: input, shape index: {}]
  %s4 = inlined_call_operand.vmem [shape: f32[32,128], index: 4, kind: input, shape index: {}]
  %s5 = inlined_call_operand.vmem [shape: f32[1,128], index: 5, kind: input, shape index: {}]
  %s6 = inlined_call_operand.vmem [shape: f32[8,32], index: 6, kind: input, shape index: {}, may-alias: {6,7}]
  %s7 = inlined_call_operand.vmem [shape: f32[8,32], index: 7, kind: input, shape index: {}, may-alias: {6,7}]
  %s8 = inlined_call_operand.vmem [shape: f32[48,128], index: 8, kind: output, shape index: {0}]
  %s9 = inlined_call_operand.hbm [shape: f32[8,32], index: 9, kind: output, shape index: {1}]
  %s10 = inlined_call_operand.hbm [shape: f32[8,32], index: 10, kind: output, shape index: {2}]
  %11 = xla_tuple %s8, %s9, %s10
  %s12 = sld [smem:[#allocation0]]
  $region58: #{sketch_decoder_forward.1} parent=0
    _
  %s14 = ssub.s32 1, %s12
  %s15 = scalar_select 0, %s14, %s12
  $region1: #{sketch_decoder_forward.1} parent=0
    #allocation2 [shape = 'u8[4096]{0}', space=vmem, size = 0x1000, scoped, tag = 'output window, operand 1, single buffered']
    #allocation3 [shape = 's32[1]{0}', space=sflag, size = 0x4, scoped, tag = 'scoped memory for sketch_decoder_forward.1']
    #allocation4 [shape = 'u8[4096]{0}', space=vmem, size = 0x1000, scoped, tag = 'output window, operand 2, single buffered']
    #allocation5 [shape = 's32[1]{0}', space=sflag, size = 0x4, scoped, tag = 'scoped memory for sketch_decoder_forward.1']
    %16 = vsyncpa [#allocation3], 0
    %17 = vsyncpa [#allocation5], 0
    // Predicated region
    $region2: #{sketch_decoder_forward.1} parent=1 // pred_check
      _
    $region3: #{sketch_decoder_forward.1} parent=1 // pred_check_branch
      %19 = sbr.rel (0) target = $region5
    $region4: #{sketch_decoder_forward.1} parent=1 // pred_region
      _
    $region5: #{sketch_decoder_forward.1} parent=1 // pred_fallthru
      _
    // Predicated region
    $region6: #{sketch_decoder_forward.1} parent=1 // pred_check
      _
    $region7: #{sketch_decoder_forward.1} parent=1 // pred_check_branch
      %21 = sbr.rel (0) target = $region9
    $region8: #{sketch_decoder_forward.1} parent=1 // pred_region
      _
    $region9: #{sketch_decoder_forward.1} parent=1 // pred_fallthru
      _
    // Predicated region
    $region10: #{sketch_decoder_forward.1} parent=1 // pred_check
      _
    $region11: #{sketch_decoder_forward.1} parent=1 // pred_check_branch
      %23 = sbr.rel (0) target = $region13
    $region12: #{sketch_decoder_forward.1} parent=1 // pred_region
      _
    $region13: #{sketch_decoder_forward.1} parent=1 // pred_fallthru
      _
    // Predicated region
    $region14: #{sketch_decoder_forward.1} parent=1 // pred_check
      _
    $region15: #{sketch_decoder_forward.1} parent=1 // pred_check_branch
      %25 = sbr.rel (0) target = $region17
    $region16: #{sketch_decoder_forward.1} parent=1 // pred_region
      _
    $region17: #{sketch_decoder_forward.1} parent=1 // pred_fallthru
      _
    // Predicated region
    $region18: #{sketch_decoder_forward.1} parent=1 // pred_check
      _
    $region19: #{sketch_decoder_forward.1} parent=1 // pred_check_branch
      %27 = sbr.rel (0) target = $region21
    $region20: #{sketch_decoder_forward.1} parent=1 // pred_region
      _
    $region21: #{sketch_decoder_forward.1} parent=1 // pred_fallthru
      _
    // Predicated region
    $region22: #{sketch_decoder_forward.1} parent=1 // pred_check
      _
    $region23: #{sketch_decoder_forward.1} parent=1 // pred_check_branch
      %29 = sbr.rel (0) target = $region25
    $region24: #{sketch_decoder_forward.1} parent=1 // pred_region
      _
    $region25: #{sketch_decoder_forward.1} parent=1 // pred_fallthru
      _
    // Predicated region
    $region26: #{sketch_decoder_forward.1} parent=1 // pred_check
      _
    $region27: #{sketch_decoder_forward.1} parent=1 // pred_check_branch
      %31 = sbr.rel (0) target = $region29
    $region28: #{sketch_decoder_forward.1} parent=1 // pred_region
      _
    $region29: #{sketch_decoder_forward.1} parent=1 // pred_fallthru
      _
    // Predicated region
    $region30: #{sketch_decoder_forward.1} parent=1 // pred_check
      _
    $region31: #{sketch_decoder_forward.1} parent=1 // pred_check_branch
      %33 = sbr.rel (0) target = $region33
    $region32: #{sketch_decoder_forward.1} parent=1 // pred_region
      _
    $region33: #{sketch_decoder_forward.1} parent=1 // pred_fallthru
      _
    %v34 = vld [vmem:[%s0] sm:$0xff]
    %v35 = vld [vmem:[%s0 + $0x8] sm:$0xff]
    %v36 = vld [vmem:[%s0 + $0x10] sm:$0xff]
    %v37 = vld [vmem:[%s0 + $0x18] sm:$0xff]
    %v38 = vld [vmem:[%s0 + $0x20] sm:$0xff]
    %v39 = vld [vmem:[%s0 + $0x28] sm:$0xff]
    %v40 = vld [vmem:[%s1] sm:$0x1f]
    %v41 = vld [vmem:[%s3] sm:$0x1]
    %v43 = vlaneseq
    %v44 = vshrl.u32 %v43, 7
    %v45 = vsub.s32 0, %v44
    %v46 = vrot.slane %v41, %v45
    %vm48 = vcmask 39936
    %v50 = vsel %vm48, %v34, 0
    %v53 = vsel %vm48, %v35, 0
    %v56 = vsel %vm48, %v36, 0
    %v59 = vsel %vm48, %v37, 0
    %v62 = vsel %vm48, %v38, 0
    %v65 = vsel %vm48, %v39, 0
    %vm67 = vcmask 1044480
    %v69 = vsel %vm67, %v40, 0
    %71 = vmatprep.subr.mxu0 0.0
    %72 = vmatpush1.msra.mxu0 0.0
    %73 = vmatprep.subr.mxu0 0.0
    %74 = vmatpush1.msra.mxu0 0.0
    %75 = vmatprep.subr.mxu0 0.0
    %76 = vmatpush1.msra.mxu0 0.0
    %77 = vmatprep.subr.mxu0 0.0
    %78 = vmatpush1.msra.mxu0 0.0
    %79 = vmatprep.subr.mxu0 0.0
    %80 = vmatpush1.msra.mxu0 0.0
    %81 = vmatprep.subr.mxu0 0.0
    %82 = vmatpush1.msra.mxu0 0.0
    %83 = vmatprep.subr.mxu0 0.0
    %84 = vmatpush1.msra.mxu0 0.0
    %85 = vmatprep.subr.mxu0 0.0
    %86 = vmatpush1.msra.mxu0 0.0
    %87 = vmatprep.subr.mxu0 0.0
    %88 = vmatpush1.msra.mxu0 0.0
    %89 = vmatprep.subr.mxu0 0.0
    %90 = vmatpush1.msra.mxu0 0.0
    %91 = vmatprep.subr.mxu0 0.0
    %92 = vmatpush1.msra.mxu0 0.0
    %93 = vmatprep.subr.mxu0 0.0
    %94 = vmatpush1.msra.mxu0 0.0
    %95 = vmatprep.subr.mxu0 0.0
    %96 = vmatpush1.msra.mxu0 0.0
    %97 = vmatprep.subr.mxu0 0.0
    %98 = vmatpush1.msra.mxu0 0.0
    %99 = vmatprep.subr.mxu0 0.0
    %100 = vmatpush1.msra.mxu0 0.0
    %101 = vmatprep.subr.mxu0 0.0
    %102 = vmatpush1.msra.mxu0 %v69
    %103 = vmatprep.subr.mxu0 0.0
    %104 = vmatpush2.msra.mxu0 0.0
    %105 = vmatprep.subr.mxu0 0.0
    %106 = vmatpush2.msra.mxu0 0.0
    %107 = vmatprep.subr.mxu0 0.0
    %108 = vmatpush2.msra.mxu0 0.0
    %109 = vmatprep.subr.mxu0 0.0
    %110 = vmatpush2.msra.mxu0 0.0
    %111 = vmatprep.subr.mxu0 0.0
    %112 = vmatpush2.msra.mxu0 0.0
    %113 = vmatprep.subr.mxu0 0.0
    %114 = vmatpush2.msra.mxu0 0.0
    %115 = vmatprep.subr.mxu0 0.0
    %116 = vmatpush2.msra.mxu0 0.0
    %117 = vmatprep.subr.mxu0 0.0
    %118 = vmatpush2.msra.mxu0 0.0
    %119 = vmatprep.subr.mxu0 0.0
    %120 = vmatpush2.msra.mxu0 0.0
    %121 = vmatprep.subr.mxu0 0.0
    %122 = vmatpush2.msra.mxu0 0.0
    %123 = vmatprep.subr.mxu0 0.0
    %124 = vmatpush2.msra.mxu0 0.0
    %125 = vmatprep.subr.mxu0 0.0
    %126 = vmatpush2.msra.mxu0 0.0
    %127 = vmatprep.subr.mxu0 0.0
    %128 = vmatpush2.msra.mxu0 0.0
    %129 = vmatprep.subr.mxu0 0.0
    %130 = vmatpush2.msra.mxu0 0.0
    %131 = vmatprep.subr.mxu0 0.0
    %132 = vmatpush2.msra.mxu0 0.0
    %133 = vmatprep.subr.mxu0 0.0
    %134 = vmatpush2.msra.mxu0 0.0
    %135 = vmatprep.mubr.f32.mxu0 0.0
    %136 = vmatmul.mubr.f32.gmra.mxu0 %v50
    %v137 = vpop.f32.mrf.mxu0
    %v138 = vadd.f32 %v46, %v137
    %v139 = vpop.f32.mrf.mxu0
    %140 = vmatprep.mubr.f32.mxu0 0.0
    %141 = vmatmul.mubr.f32.gmra.mxu0 %v53
    %v142 = vpop.f32.mrf.mxu0
    %v143 = vadd.f32 %v46, %v142
    %v144 = vpop.f32.mrf.mxu0
    %145 = vmatprep.mubr.f32.mxu0 0.0
    %146 = vmatmul.mubr.f32.gmra.mxu0 %v56
    %v147 = vpop.f32.mrf.mxu0
    %v148 = vadd.f32 %v46, %v147
    %v149 = vpop.f32.mrf.mxu0
    %150 = vmatprep.mubr.f32.mxu0 0.0
    %151 = vmatmul.mubr.f32.gmra.mxu0 %v59
    %v152 = vpop.f32.mrf.mxu0
    %v153 = vadd.f32 %v46, %v152
    %v154 = vpop.f32.mrf.mxu0
    %155 = vmatprep.mubr.f32.mxu0 0.0
    %156 = vmatmul.mubr.f32.gmra.mxu0 %v62
    %v157 = vpop.f32.mrf.mxu0
    %v158 = vadd.f32 %v46, %v157
    %v159 = vpop.f32.mrf.mxu0
    %160 = vmatprep.mubr.f32.mxu0 0.0
    %161 = vmatmul.mubr.f32.gmra.mxu0 %v65
    %v162 = vpop.f32.mrf.mxu0
    %v163 = vadd.f32 %v46, %v162
    %v164 = vpop.f32.mrf.mxu0
    %165 = vdwg.mxu0
    %v166 = vld [vmem:[%s2] sm:$0xff]
    %v167 = vld [vmem:[%s2 + $0x8] sm:$0xff]
    %v168 = vld [vmem:[%s2 + $0x10] sm:$0xff]
    %v169 = vld [vmem:[%s2 + $0x18] sm:$0xff]
    %v170 = vld [vmem:[%s6] sm:$0xff]
    %v171 = vld [vmem:[%s7] sm:$0xff]
    %vm172 = vcmask 261120
    %v174 = vsel %vm172, %v170, 0
    %176 = vmatprep.subr.mxu0 0.0
    %177 = vmatpush1.msra.mxu0 0.0
    %178 = vmatprep.subr.mxu0 0.0
    %179 = vmatpush1.msra.mxu0 0.0
    %180 = vmatprep.subr.mxu0 0.0
    %181 = vmatpush1.msra.mxu0 0.0
    %182 = vmatprep.subr.mxu0 0.0
    %183 = vmatpush1.msra.mxu0 0.0
    %184 = vmatprep.subr.mxu0 0.0
    %185 = vmatpush1.msra.mxu0 0.0
    %186 = vmatprep.subr.mxu0 0.0
    %187 = vmatpush1.msra.mxu0 0.0
    %188 = vmatprep.subr.mxu0 0.0
    %189 = vmatpush1.msra.mxu0 0.0
    %190 = vmatprep.subr.mxu0 0.0
    %191 = vmatpush1.msra.mxu0 0.0
    %192 = vmatprep.subr.mxu0 0.0
    %193 = vmatpush1.msra.mxu0 0.0
    %194 = vmatprep.subr.mxu0 0.0
    %195 = vmatpush1.msra.mxu0 0.0
    %196 = vmatprep.subr.mxu0 0.0
    %197 = vmatpush1.msra.mxu0 0.0
    %198 = vmatprep.subr.mxu0 0.0
    %199 = vmatpush1.msra.mxu0 0.0
    %200 = vmatprep.subr.mxu0 0.0
    %201 = vmatpush1.msra.mxu0 %v169
    %202 = vmatprep.subr.mxu0 0.0
    %203 = vmatpush1.msra.mxu0 %v168
    %204 = vmatprep.subr.mxu0 0.0
    %205 = vmatpush1.msra.mxu0 %v167
    %206 = vmatprep.subr.mxu0 0.0
    %207 = vmatpush1.msra.mxu0 %v166
    %208 = vmatprep.subr.mxu0 0.0
    %209 = vmatpush2.msra.mxu0 0.0
    %210 = vmatprep.subr.mxu0 0.0
    %211 = vmatpush2.msra.mxu0 0.0
    %212 = vmatprep.subr.mxu0 0.0
    %213 = vmatpush2.msra.mxu0 0.0
    %214 = vmatprep.subr.mxu0 0.0
    %215 = vmatpush2.msra.mxu0 0.0
    %216 = vmatprep.subr.mxu0 0.0
    %217 = vmatpush2.msra.mxu0 0.0
    %218 = vmatprep.subr.mxu0 0.0
    %219 = vmatpush2.msra.mxu0 0.0
    %220 = vmatprep.subr.mxu0 0.0
    %221 = vmatpush2.msra.mxu0 0.0
    %222 = vmatprep.subr.mxu0 0.0
    %223 = vmatpush2.msra.mxu0 0.0
    %224 = vmatprep.subr.mxu0 0.0
    %225 = vmatpush2.msra.mxu0 0.0
    %226 = vmatprep.subr.mxu0 0.0
    %227 = vmatpush2.msra.mxu0 0.0
    %228 = vmatprep.subr.mxu0 0.0
    %229 = vmatpush2.msra.mxu0 0.0
    %230 = vmatprep.subr.mxu0 0.0
    %231 = vmatpush2.msra.mxu0 0.0
    %232 = vmatprep.subr.mxu0 0.0
    %233 = vmatpush2.msra.mxu0 0.0
    %234 = vmatprep.subr.mxu0 0.0
    %235 = vmatpush2.msra.mxu0 0.0
    %236 = vmatprep.subr.mxu0 0.0
    %237 = vmatpush2.msra.mxu0 0.0
    %238 = vmatprep.subr.mxu0 0.0
    %239 = vmatpush2.msra.mxu0 0.0
    %240 = vmatprep.mubr.f32.mxu0 0.0
    %241 = vmatmul.mubr.f32.gmra.mxu0 %v174
    %v242 = vpop.f32.mrf.mxu0
    %v243 = vadd.f32 0.0, %v242
    %v244 = vpop.f32.mrf.mxu0
    %245 = vdwg.mxu0
    %v246 = vadd.f32 %v138, %v243
    %v247 = vxor.u32 %v246, 2147483648
    %v248 = vmul.f32 %v247, 1.442695
    %v249 = vpow.pop %v248
    %v250 = vadd.f32 %v249, 1.0
    %v251 = vrcp.pop %v250
    %v252 = vmul.f32 1.0, %v251
    %v253 = vtanh.pop %v246
    %255 = vrot.lane.b32.xlu0 %v171, 32
    %v256 = vpop.permute.xlu0 %255
    %v258 = vmul.f32 %v252, %v256
    %260 = vrot.lane.b32.xlu0 %v253, 64
    %v261 = vpop.permute.xlu0 %260
    %v263 = vmul.f32 %v252, %v261
    %265 = vrot.lane.b32.xlu0 %v263, 32
    %v266 = vpop.permute.xlu0 %265
    %v268 = vadd.f32 %v258, %v266
    %v269 = vtanh.pop %v268
    %271 = vrot.lane.b32.xlu0 %v269, 64
    %v272 = vpop.permute.xlu0 %271
    %v274 = vmul.f32 %v252, %v272
    %276 = vrot.lane.b32.xlu0 %v274, 32
    %v277 = vpop.permute.xlu0 %276
    %v278 = vsel %vm172, %v277, 0
    %280 = vmatprep.subr.mxu0 0.0
    %281 = vmatpush1.msra.mxu0 0.0
    %282 = vmatprep.subr.mxu0 0.0
    %283 = vmatpush1.msra.mxu0 0.0
    %284 = vmatprep.subr.mxu0 0.0
    %285 = vmatpush1.msra.mxu0 0.0
    %286 = vmatprep.subr.mxu0 0.0
    %287 = vmatpush1.msra.mxu0 0.0
    %288 = vmatprep.subr.mxu0 0.0
    %289 = vmatpush1.msra.mxu0 0.0
    %290 = vmatprep.subr.mxu0 0.0
    %291 = vmatpush1.msra.mxu0 0.0
    %292 = vmatprep.subr.mxu0 0.0
    %293 = vmatpush1.msra.mxu0 0.0
    %294 = vmatprep.subr.mxu0 0.0
    %295 = vmatpush1.msra.mxu0 0.0
    %296 = vmatprep.subr.mxu0 0.0
    %297 = vmatpush1.msra.mxu0 0.0
    %298 = vmatprep.subr.mxu0 0.0
    %299 = vmatpush1.msra.mxu0 0.0
    %300 = vmatprep.subr.mxu0 0.0
    %301 = vmatpush1.msra.mxu0 0.0
    %302 = vmatprep.subr.mxu0 0.0
    %303 = vmatpush1.msra.mxu0 0.0
    %304 = vmatprep.subr.mxu0 0.0
    %305 = vmatpush1.msra.mxu0 %v169
    %306 = vmatprep.subr.mxu0 0.0
    %307 = vmatpush1.msra.mxu0 %v168
    %308 = vmatprep.subr.mxu0 0.0
    %309 = vmatpush1.msra.mxu0 %v167
    %310 = vmatprep.subr.mxu0 0.0
    %311 = vmatpush1.msra.mxu0 %v166
    %312 = vmatprep.subr.mxu0 0.0
    %313 = vmatpush2.msra.mxu0 0.0
    %314 = vmatprep.subr.mxu0 0.0
    %315 = vmatpush2.msra.mxu0 0.0
    %316 = vmatprep.subr.mxu0 0.0
    %317 = vmatpush2.msra.mxu0 0.0
    %318 = vmatprep.subr.mxu0 0.0
    %319 = vmatpush2.msra.mxu0 0.0
    %320 = vmatprep.subr.mxu0 0.0
    %321 = vmatpush2.msra.mxu0 0.0
    %322 = vmatprep.subr.mxu0 0.0
    %323 = vmatpush2.msra.mxu0 0.0
    %324 = vmatprep.subr.mxu0 0.0
    %325 = vmatpush2.msra.mxu0 0.0
    %326 = vmatprep.subr.mxu0 0.0
    %327 = vmatpush2.msra.mxu0 0.0
    %328 = vmatprep.subr.mxu0 0.0
    %329 = vmatpush2.msra.mxu0 0.0
    %330 = vmatprep.subr.mxu0 0.0
    %331 = vmatpush2.msra.mxu0 0.0
    %332 = vmatprep.subr.mxu0 0.0
    %333 = vmatpush2.msra.mxu0 0.0
    %334 = vmatprep.subr.mxu0 0.0
    %335 = vmatpush2.msra.mxu0 0.0
    %336 = vmatprep.subr.mxu0 0.0
    %337 = vmatpush2.msra.mxu0 0.0
    %338 = vmatprep.subr.mxu0 0.0
    %339 = vmatpush2.msra.mxu0 0.0
    %340 = vmatprep.subr.mxu0 0.0
    %341 = vmatpush2.msra.mxu0 0.0
    %342 = vmatprep.subr.mxu0 0.0
    %343 = vmatpush2.msra.mxu0 0.0
    %344 = vmatprep.mubr.f32.mxu0 0.0
    %345 = vmatmul.mubr.f32.gmra.mxu0 %v278
    %v346 = vpop.f32.mrf.mxu0
    %v347 = vadd.f32 0.0, %v346
    %v348 = vpop.f32.mrf.mxu0
    %349 = vdwg.mxu0
    %v350 = vadd.f32 %v143, %v347
    %v351 = vxor.u32 %v350, 2147483648
    %v352 = vmul.f32 %v351, 1.442695
    %v353 = vpow.pop %v352
    %v354 = vadd.f32 %v353, 1.0
    %v355 = vrcp.pop %v354
    %v356 = vmul.f32 1.0, %v355
    %v357 = vtanh.pop %v350
    %v358 = vmul.f32 %v356, %v268
    %360 = vrot.lane.b32.xlu0 %v357, 64
    %v361 = vpop.permute.xlu0 %360
    %v363 = vmul.f32 %v356, %v361
    %365 = vrot.lane.b32.xlu0 %v363, 32
    %v366 = vpop.permute.xlu0 %365
    %v368 = vadd.f32 %v358, %v366
    %v369 = vtanh.pop %v368
    %371 = vrot.lane.b32.xlu0 %v369, 64
    %v372 = vpop.permute.xlu0 %371
    %v374 = vmul.f32 %v356, %v372
    %376 = vrot.lane.b32.xlu0 %v374, 32
    %v377 = vpop.permute.xlu0 %376
    %v378 = vsel %vm172, %v377, 0
    %380 = vmatprep.subr.mxu0 0.0
    %381 = vmatpush1.msra.mxu0 0.0
    %382 = vmatprep.subr.mxu0 0.0
    %383 = vmatpush1.msra.mxu0 0.0
    %384 = vmatprep.subr.mxu0 0.0
    %385 = vmatpush1.msra.mxu0 0.0
    %386 = vmatprep.subr.mxu0 0.0
    %387 = vmatpush1.msra.mxu0 0.0
    %388 = vmatprep.subr.mxu0 0.0
    %389 = vmatpush1.msra.mxu0 0.0
    %390 = vmatprep.subr.mxu0 0.0
    %391 = vmatpush1.msra.mxu0 0.0
    %392 = vmatprep.subr.mxu0 0.0
    %393 = vmatpush1.msra.mxu0 0.0
    %394 = vmatprep.subr.mxu0 0.0
    %395 = vmatpush1.msra.mxu0 0.0
    %396 = vmatprep.subr.mxu0 0.0
    %397 = vmatpush1.msra.mxu0 0.0
    %398 = vmatprep.subr.mxu0 0.0
    %399 = vmatpush1.msra.mxu0 0.0
    %400 = vmatprep.subr.mxu0 0.0
    %401 = vmatpush1.msra.mxu0 0.0
    %402 = vmatprep.subr.mxu0 0.0
    %403 = vmatpush1.msra.mxu0 0.0
    %404 = vmatprep.subr.mxu0 0.0
    %405 = vmatpush1.msra.mxu0 %v169
    %406 = vmatprep.subr.mxu0 0.0
    %407 = vmatpush1.msra.mxu0 %v168
    %408 = vmatprep.subr.mxu0 0.0
    %409 = vmatpush1.msra.mxu0 %v167
    %410 = vmatprep.subr.mxu0 0.0
    %411 = vmatpush1.msra.mxu0 %v166
    %412 = vmatprep.subr.mxu0 0.0
    %413 = vmatpush2.msra.mxu0 0.0
    %414 = vmatprep.subr.mxu0 0.0
    %415 = vmatpush2.msra.mxu0 0.0
    %416 = vmatprep.subr.mxu0 0.0
    %417 = vmatpush2.msra.mxu0 0.0
    %418 = vmatprep.subr.mxu0 0.0
    %419 = vmatpush2.msra.mxu0 0.0
    %420 = vmatprep.subr.mxu0 0.0
    %421 = vmatpush2.msra.mxu0 0.0
    %422 = vmatprep.subr.mxu0 0.0
    %423 = vmatpush2.msra.mxu0 0.0
    %424 = vmatprep.subr.mxu0 0.0
    %425 = vmatpush2.msra.mxu0 0.0
    %426 = vmatprep.subr.mxu0 0.0
    %427 = vmatpush2.msra.mxu0 0.0
    %428 = vmatprep.subr.mxu0 0.0
    %429 = vmatpush2.msra.mxu0 0.0
    %430 = vmatprep.subr.mxu0 0.0
    %431 = vmatpush2.msra.mxu0 0.0
    %432 = vmatprep.subr.mxu0 0.0
    %433 = vmatpush2.msra.mxu0 0.0
    %434 = vmatprep.subr.mxu0 0.0
    %435 = vmatpush2.msra.mxu0 0.0
    %436 = vmatprep.subr.mxu0 0.0
    %437 = vmatpush2.msra.mxu0 0.0
    %438 = vmatprep.subr.mxu0 0.0
    %439 = vmatpush2.msra.mxu0 0.0
    %440 = vmatprep.subr.mxu0 0.0
    %441 = vmatpush2.msra.mxu0 0.0
    %442 = vmatprep.subr.mxu0 0.0
    %443 = vmatpush2.msra.mxu0 0.0
    %444 = vmatprep.mubr.f32.mxu0 0.0
    %445 = vmatmul.mubr.f32.gmra.mxu0 %v378
    %v446 = vpop.f32.mrf.mxu0
    %v447 = vadd.f32 0.0, %v446
    %v448 = vpop.f32.mrf.mxu0
    %449 = vdwg.mxu0
    %v450 = vadd.f32 %v148, %v447
    %v451 = vxor.u32 %v450, 2147483648
    %v452 = vmul.f32 %v451, 1.442695
    %v453 = vpow.pop %v452
    %v454 = vadd.f32 %v453, 1.0
    %v455 = vrcp.pop %v454
    %v456 = vmul.f32 1.0, %v455
    %v457 = vtanh.pop %v450
    %v458 = vmul.f32 %v456, %v368
    %460 = vrot.lane.b32.xlu0 %v457, 64
    %v461 = vpop.permute.xlu0 %460
    %v463 = vmul.f32 %v456, %v461
    %465 = vrot.lane.b32.xlu0 %v463, 32
    %v466 = vpop.permute.xlu0 %465
    %v468 = vadd.f32 %v458, %v466
    %v469 = vtanh.pop %v468
    %471 = vrot.lane.b32.xlu0 %v469, 64
    %v472 = vpop.permute.xlu0 %471
    %v474 = vmul.f32 %v456, %v472
    %476 = vrot.lane.b32.xlu0 %v474, 32
    %v477 = vpop.permute.xlu0 %476
    %v478 = vsel %vm172, %v477, 0
    %480 = vmatprep.subr.mxu0 0.0
    %481 = vmatpush1.msra.mxu0 0.0
    %482 = vmatprep.subr.mxu0 0.0
    %483 = vmatpush1.msra.mxu0 0.0
    %484 = vmatprep.subr.mxu0 0.0
    %485 = vmatpush1.msra.mxu0 0.0
    %486 = vmatprep.subr.mxu0 0.0
    %487 = vmatpush1.msra.mxu0 0.0
    %488 = vmatprep.subr.mxu0 0.0
    %489 = vmatpush1.msra.mxu0 0.0
    %490 = vmatprep.subr.mxu0 0.0
    %491 = vmatpush1.msra.mxu0 0.0
    %492 = vmatprep.subr.mxu0 0.0
    %493 = vmatpush1.msra.mxu0 0.0
    %494 = vmatprep.subr.mxu0 0.0
    %495 = vmatpush1.msra.mxu0 0.0
    %496 = vmatprep.subr.mxu0 0.0
    %497 = vmatpush1.msra.mxu0 0.0
    %498 = vmatprep.subr.mxu0 0.0
    %499 = vmatpush1.msra.mxu0 0.0
    %500 = vmatprep.subr.mxu0 0.0
    %501 = vmatpush1.msra.mxu0 0.0
    %502 = vmatprep.subr.mxu0 0.0
    %503 = vmatpush1.msra.mxu0 0.0
    %504 = vmatprep.subr.mxu0 0.0
    %505 = vmatpush1.msra.mxu0 %v169
    %506 = vmatprep.subr.mxu0 0.0
    %507 = vmatpush1.msra.mxu0 %v168
    %508 = vmatprep.subr.mxu0 0.0
    %509 = vmatpush1.msra.mxu0 %v167
    %510 = vmatprep.subr.mxu0 0.0
    %511 = vmatpush1.msra.mxu0 %v166
    %512 = vmatprep.subr.mxu0 0.0
    %513 = vmatpush2.msra.mxu0 0.0
    %514 = vmatprep.subr.mxu0 0.0
    %515 = vmatpush2.msra.mxu0 0.0
    %516 = vmatprep.subr.mxu0 0.0
    %517 = vmatpush2.msra.mxu0 0.0
    %518 = vmatprep.subr.mxu0 0.0
    %519 = vmatpush2.msra.mxu0 0.0
    %520 = vmatprep.subr.mxu0 0.0
    %521 = vmatpush2.msra.mxu0 0.0
    %522 = vmatprep.subr.mxu0 0.0
    %523 = vmatpush2.msra.mxu0 0.0
    %524 = vmatprep.subr.mxu0 0.0
    %525 = vmatpush2.msra.mxu0 0.0
    %526 = vmatprep.subr.mxu0 0.0
    %527 = vmatpush2.msra.mxu0 0.0
    %528 = vmatprep.subr.mxu0 0.0
    %529 = vmatpush2.msra.mxu0 0.0
    %530 = vmatprep.subr.mxu0 0.0
    %531 = vmatpush2.msra.mxu0 0.0
    %532 = vmatprep.subr.mxu0 0.0
    %533 = vmatpush2.msra.mxu0 0.0
    %534 = vmatprep.subr.mxu0 0.0
    %535 = vmatpush2.msra.mxu0 0.0
    %536 = vmatprep.subr.mxu0 0.0
    %537 = vmatpush2.msra.mxu0 0.0
    %538 = vmatprep.subr.mxu0 0.0
    %539 = vmatpush2.msra.mxu0 0.0
    %540 = vmatprep.subr.mxu0 0.0
    %541 = vmatpush2.msra.mxu0 0.0
    %542 = vmatprep.subr.mxu0 0.0
    %543 = vmatpush2.msra.mxu0 0.0
    %544 = vmatprep.mubr.f32.mxu0 0.0
    %545 = vmatmul.mubr.f32.gmra.mxu0 %v478
    %v546 = vpop.f32.mrf.mxu0
    %v547 = vadd.f32 0.0, %v546
    %v548 = vpop.f32.mrf.mxu0
    %549 = vdwg.mxu0
    %v550 = vadd.f32 %v153, %v547
    %v551 = vxor.u32 %v550, 2147483648
    %v552 = vmul.f32 %v551, 1.442695
    %v553 = vpow.pop %v552
    %v554 = vadd.f32 %v553, 1.0
    %v555 = vrcp.pop %v554
    %v556 = vmul.f32 1.0, %v555
    %v557 = vtanh.pop %v550
    %v558 = vmul.f32 %v556, %v468
    %560 = vrot.lane.b32.xlu0 %v557, 64
    %v561 = vpop.permute.xlu0 %560
    %v563 = vmul.f32 %v556, %v561
    %565 = vrot.lane.b32.xlu0 %v563, 32
    %v566 = vpop.permute.xlu0 %565
    %v568 = vadd.f32 %v558, %v566
    %v569 = vtanh.pop %v568
    %571 = vrot.lane.b32.xlu0 %v569, 64
    %v572 = vpop.permute.xlu0 %571
    %v574 = vmul.f32 %v556, %v572
    %576 = vrot.lane.b32.xlu0 %v574, 32
    %v577 = vpop.permute.xlu0 %576
    %v578 = vsel %vm172, %v577, 0
    %580 = vmatprep.subr.mxu0 0.0
    %581 = vmatpush1.msra.mxu0 0.0
    %582 = vmatprep.subr.mxu0 0.0
    %583 = vmatpush1.msra.mxu0 0.0
    %584 = vmatprep.subr.mxu0 0.0
    %585 = vmatpush1.msra.mxu0 0.0
    %586 = vmatprep.subr.mxu0 0.0
    %587 = vmatpush1.msra.mxu0 0.0
    %588 = vmatprep.subr.mxu0 0.0
    %589 = vmatpush1.msra.mxu0 0.0
    %590 = vmatprep.subr.mxu0 0.0
    %591 = vmatpush1.msra.mxu0 0.0
    %592 = vmatprep.subr.mxu0 0.0
    %593 = vmatpush1.msra.mxu0 0.0
    %594 = vmatprep.subr.mxu0 0.0
    %595 = vmatpush1.msra.mxu0 0.0
    %596 = vmatprep.subr.mxu0 0.0
    %597 = vmatpush1.msra.mxu0 0.0
    %598 = vmatprep.subr.mxu0 0.0
    %599 = vmatpush1.msra.mxu0 0.0
    %600 = vmatprep.subr.mxu0 0.0
    %601 = vmatpush1.msra.mxu0 0.0
    %602 = vmatprep.subr.mxu0 0.0
    %603 = vmatpush1.msra.mxu0 0.0
    %604 = vmatprep.subr.mxu0 0.0
    %605 = vmatpush1.msra.mxu0 %v169
    %606 = vmatprep.subr.mxu0 0.0
    %607 = vmatpush1.msra.mxu0 %v168
    %608 = vmatprep.subr.mxu0 0.0
    %609 = vmatpush1.msra.mxu0 %v167
    %610 = vmatprep.subr.mxu0 0.0
    %611 = vmatpush1.msra.mxu0 %v166
    %612 = vmatprep.subr.mxu0 0.0
    %613 = vmatpush2.msra.mxu0 0.0
    %614 = vmatprep.subr.mxu0 0.0
    %615 = vmatpush2.msra.mxu0 0.0
    %616 = vmatprep.subr.mxu0 0.0
    %617 = vmatpush2.msra.mxu0 0.0
    %618 = vmatprep.subr.mxu0 0.0
    %619 = vmatpush2.msra.mxu0 0.0
    %620 = vmatprep.subr.mxu0 0.0
    %621 = vmatpush2.msra.mxu0 0.0
    %622 = vmatprep.subr.mxu0 0.0
    %623 = vmatpush2.msra.mxu0 0.0
    %624 = vmatprep.subr.mxu0 0.0
    %625 = vmatpush2.msra.mxu0 0.0
    %626 = vmatprep.subr.mxu0 0.0
    %627 = vmatpush2.msra.mxu0 0.0
    %628 = vmatprep.subr.mxu0 0.0
    %629 = vmatpush2.msra.mxu0 0.0
    %630 = vmatprep.subr.mxu0 0.0
    %631 = vmatpush2.msra.mxu0 0.0
    %632 = vmatprep.subr.mxu0 0.0
    %633 = vmatpush2.msra.mxu0 0.0
    %634 = vmatprep.subr.mxu0 0.0
    %635 = vmatpush2.msra.mxu0 0.0
    %636 = vmatprep.subr.mxu0 0.0
    %637 = vmatpush2.msra.mxu0 0.0
    %638 = vmatprep.subr.mxu0 0.0
    %639 = vmatpush2.msra.mxu0 0.0
    %640 = vmatprep.subr.mxu0 0.0
    %641 = vmatpush2.msra.mxu0 0.0
    %642 = vmatprep.subr.mxu0 0.0
    %643 = vmatpush2.msra.mxu0 0.0
    %644 = vmatprep.mubr.f32.mxu0 0.0
    %645 = vmatmul.mubr.f32.gmra.mxu0 %v578
    %v646 = vpop.f32.mrf.mxu0
    %v647 = vadd.f32 0.0, %v646
    %v648 = vpop.f32.mrf.mxu0
    %649 = vdwg.mxu0
    %v650 = vadd.f32 %v158, %v647
    %v651 = vxor.u32 %v650, 2147483648
    %v652 = vmul.f32 %v651, 1.442695
    %v653 = vpow.pop %v652
    %v654 = vadd.f32 %v653, 1.0
    %v655 = vrcp.pop %v654
    %v656 = vmul.f32 1.0, %v655
    %v657 = vtanh.pop %v650
    %v658 = vmul.f32 %v656, %v568
    %660 = vrot.lane.b32.xlu0 %v657, 64
    %v661 = vpop.permute.xlu0 %660
    %v663 = vmul.f32 %v656, %v661
    %665 = vrot.lane.b32.xlu0 %v663, 32
    %v666 = vpop.permute.xlu0 %665
    %v668 = vadd.f32 %v658, %v666
    %v669 = vtanh.pop %v668
    %671 = vrot.lane.b32.xlu0 %v669, 64
    %v672 = vpop.permute.xlu0 %671
    %v674 = vmul.f32 %v656, %v672
    %676 = vrot.lane.b32.xlu0 %v674, 32
    %v677 = vpop.permute.xlu0 %676
    %v678 = vsel %vm172, %v677, 0
    %680 = vmatprep.subr.mxu0 0.0
    %681 = vmatpush1.msra.mxu0 0.0
    %682 = vmatprep.subr.mxu0 0.0
    %683 = vmatpush1.msra.mxu0 0.0
    %684 = vmatprep.subr.mxu0 0.0
    %685 = vmatpush1.msra.mxu0 0.0
    %686 = vmatprep.subr.mxu0 0.0
    %687 = vmatpush1.msra.mxu0 0.0
    %688 = vmatprep.subr.mxu0 0.0
    %689 = vmatpush1.msra.mxu0 0.0
    %690 = vmatprep.subr.mxu0 0.0
    %691 = vmatpush1.msra.mxu0 0.0
    %692 = vmatprep.subr.mxu0 0.0
    %693 = vmatpush1.msra.mxu0 0.0
    %694 = vmatprep.subr.mxu0 0.0
    %695 = vmatpush1.msra.mxu0 0.0
    %696 = vmatprep.subr.mxu0 0.0
    %697 = vmatpush1.msra.mxu0 0.0
    %698 = vmatprep.subr.mxu0 0.0
    %699 = vmatpush1.msra.mxu0 0.0
    %700 = vmatprep.subr.mxu0 0.0
    %701 = vmatpush1.msra.mxu0 0.0
    %702 = vmatprep.subr.mxu0 0.0
    %703 = vmatpush1.msra.mxu0 0.0
    %704 = vmatprep.subr.mxu0 0.0
    %705 = vmatpush1.msra.mxu0 %v169
    %706 = vmatprep.subr.mxu0 0.0
    %707 = vmatpush1.msra.mxu0 %v168
    %708 = vmatprep.subr.mxu0 0.0
    %709 = vmatpush1.msra.mxu0 %v167
    %710 = vmatprep.subr.mxu0 0.0
    %711 = vmatpush1.msra.mxu0 %v166
    %712 = vmatprep.subr.mxu0 0.0
    %713 = vmatpush2.msra.mxu0 0.0
    %714 = vmatprep.subr.mxu0 0.0
    %715 = vmatpush2.msra.mxu0 0.0
    %716 = vmatprep.subr.mxu0 0.0
    %717 = vmatpush2.msra.mxu0 0.0
    %718 = vmatprep.subr.mxu0 0.0
    %719 = vmatpush2.msra.mxu0 0.0
    %720 = vmatprep.subr.mxu0 0.0
    %721 = vmatpush2.msra.mxu0 0.0
    %722 = vmatprep.subr.mxu0 0.0
    %723 = vmatpush2.msra.mxu0 0.0
    %724 = vmatprep.subr.mxu0 0.0
    %725 = vmatpush2.msra.mxu0 0.0
    %726 = vmatprep.subr.mxu0 0.0
    %727 = vmatpush2.msra.mxu0 0.0
    %728 = vmatprep.subr.mxu0 0.0
    %729 = vmatpush2.msra.mxu0 0.0
    %730 = vmatprep.subr.mxu0 0.0
    %731 = vmatpush2.msra.mxu0 0.0
    %732 = vmatprep.subr.mxu0 0.0
    %733 = vmatpush2.msra.mxu0 0.0
    %734 = vmatprep.subr.mxu0 0.0
    %735 = vmatpush2.msra.mxu0 0.0
    %736 = vmatprep.subr.mxu0 0.0
    %737 = vmatpush2.msra.mxu0 0.0
    %738 = vmatprep.subr.mxu0 0.0
    %739 = vmatpush2.msra.mxu0 0.0
    %740 = vmatprep.subr.mxu0 0.0
    %741 = vmatpush2.msra.mxu0 0.0
    %742 = vmatprep.subr.mxu0 0.0
    %743 = vmatpush2.msra.mxu0 0.0
    %744 = vmatprep.mubr.f32.mxu0 0.0
    %745 = vmatmul.mubr.f32.gmra.mxu0 %v678
    %v746 = vpop.f32.mrf.mxu0
    %v747 = vadd.f32 0.0, %v746
    %v748 = vpop.f32.mrf.mxu0
    %749 = vdwg.mxu0
    %v750 = vadd.f32 %v163, %v747
    %v751 = vxor.u32 %v750, 2147483648
    %v752 = vmul.f32 %v751, 1.442695
    %v753 = vpow.pop %v752
    %v754 = vadd.f32 %v753, 1.0
    %v755 = vrcp.pop %v754
    %v756 = vmul.f32 1.0, %v755
    %v757 = vtanh.pop %v750
    %v758 = vmul.f32 %v756, %v668
    %760 = vrot.lane.b32.xlu0 %v757, 64
    %v761 = vpop.permute.xlu0 %760
    %v763 = vmul.f32 %v756, %v761
    %765 = vrot.lane.b32.xlu0 %v763, 32
    %v766 = vpop.permute.xlu0 %765
    %v768 = vadd.f32 %v758, %v766
    %v769 = vtanh.pop %v768
    %771 = vrot.lane.b32.xlu0 %v769, 64
    %v772 = vpop.permute.xlu0 %771
    %v774 = vmul.f32 %v756, %v772
    %776 = vrot.lane.b32.xlu0 %v774, 32
    %v777 = vpop.permute.xlu0 %776
    %779 = vst.msk [vmem:[#allocation2] sm:$0xff] %vm172, %v777
    %781 = vrot.lane.b32.xlu0 %v768, 96
    %v782 = vpop.permute.xlu0 %781
    %784 = vst.msk [vmem:[#allocation4] sm:$0xff] %vm172, %v782
    %v785 = vld [vmem:[%s4] sm:$0xff]
    %v786 = vld [vmem:[%s4 + $0x8] sm:$0xff]
    %v787 = vld [vmem:[%s4 + $0x10] sm:$0xff]
    %v788 = vld [vmem:[%s4 + $0x18] sm:$0xff]
    %v789 = vld [vmem:[%s5] sm:$0x1]
    %v791 = vlaneseq
    %v792 = vshrl.u32 %v791, 7
    %v793 = vsub.s32 0, %v792
    %v794 = vrot.slane %v789, %v793
    %v796 = vsel %vm172, %v777, 0
    %798 = vmatprep.subr.mxu0 0.0
    %799 = vmatpush1.msra.mxu0 0.0
    %800 = vmatprep.subr.mxu0 0.0
    %801 = vmatpush1.msra.mxu0 0.0
    %802 = vmatprep.subr.mxu0 0.0
    %803 = vmatpush1.msra.mxu0 0.0
    %804 = vmatprep.subr.mxu0 0.0
    %805 = vmatpush1.msra.mxu0 0.0
    %806 = vmatprep.subr.mxu0 0.0
    %807 = vmatpush1.msra.mxu0 0.0
    %808 = vmatprep.subr.mxu0 0.0
    %809 = vmatpush1.msra.mxu0 0.0
    %810 = vmatprep.subr.mxu0 0.0
    %811 = vmatpush1.msra.mxu0 0.0
    %812 = vmatprep.subr.mxu0 0.0
    %813 = vmatpush1.msra.mxu0 0.0
    %814 = vmatprep.subr.mxu0 0.0
    %815 = vmatpush1.msra.mxu0 0.0
    %816 = vmatprep.subr.mxu0 0.0
    %817 = vmatpush1.msra.mxu0 0.0
    %818 = vmatprep.subr.mxu0 0.0
    %819 = vmatpush1.msra.mxu0 0.0
    %820 = vmatprep.subr.mxu0 0.0
    %821 = vmatpush1.msra.mxu0 0.0
    %822 = vmatprep.subr.mxu0 0.0
    %823 = vmatpush1.msra.mxu0 %v788
    %824 = vmatprep.subr.mxu0 0.0
    %825 = vmatpush1.msra.mxu0 %v787
    %826 = vmatprep.subr.mxu0 0.0
    %827 = vmatpush1.msra.mxu0 %v786
    %828 = vmatprep.subr.mxu0 0.0
    %829 = vmatpush1.msra.mxu0 %v785
    %830 = vmatprep.subr.mxu0 0.0
    %831 = vmatpush2.msra.mxu0 0.0
    %832 = vmatprep.subr.mxu0 0.0
    %833 = vmatpush2.msra.mxu0 0.0
    %834 = vmatprep.subr.mxu0 0.0
    %835 = vmatpush2.msra.mxu0 0.0
    %836 = vmatprep.subr.mxu0 0.0
    %837 = vmatpush2.msra.mxu0 0.0
    %838 = vmatprep.subr.mxu0 0.0
    %839 = vmatpush2.msra.mxu0 0.0
    %840 = vmatprep.subr.mxu0 0.0
    %841 = vmatpush2.msra.mxu0 0.0
    %842 = vmatprep.subr.mxu0 0.0
    %843 = vmatpush2.msra.mxu0 0.0
    %844 = vmatprep.subr.mxu0 0.0
    %845 = vmatpush2.msra.mxu0 0.0
    %846 = vmatprep.subr.mxu0 0.0
    %847 = vmatpush2.msra.mxu0 0.0
    %848 = vmatprep.subr.mxu0 0.0
    %849 = vmatpush2.msra.mxu0 0.0
    %850 = vmatprep.subr.mxu0 0.0
    %851 = vmatpush2.msra.mxu0 0.0
    %852 = vmatprep.subr.mxu0 0.0
    %853 = vmatpush2.msra.mxu0 0.0
    %854 = vmatprep.subr.mxu0 0.0
    %855 = vmatpush2.msra.mxu0 0.0
    %856 = vmatprep.subr.mxu0 0.0
    %857 = vmatpush2.msra.mxu0 0.0
    %858 = vmatprep.subr.mxu0 0.0
    %859 = vmatpush2.msra.mxu0 0.0
    %860 = vmatprep.subr.mxu0 0.0
    %861 = vmatpush2.msra.mxu0 0.0
    %862 = vmatprep.mubr.f32.mxu0 0.0
    %863 = vmatmul.mubr.f32.gmra.mxu0 %v278
    %v864 = vpop.f32.mrf.mxu0
    %v865 = vadd.f32 %v794, %v864
    %v866 = vpop.f32.mrf.mxu0
    %867 = vmatprep.mubr.f32.mxu0 0.0
    %868 = vmatmul.mubr.f32.gmra.mxu0 %v378
    %v869 = vpop.f32.mrf.mxu0
    %v870 = vadd.f32 %v794, %v869
    %v871 = vpop.f32.mrf.mxu0
    %872 = vmatprep.mubr.f32.mxu0 0.0
    %873 = vmatmul.mubr.f32.gmra.mxu0 %v478
    %v874 = vpop.f32.mrf.mxu0
    %v875 = vadd.f32 %v794, %v874
    %v876 = vpop.f32.mrf.mxu0
    %877 = vmatprep.mubr.f32.mxu0 0.0
    %878 = vmatmul.mubr.f32.gmra.mxu0 %v578
    %v879 = vpop.f32.mrf.mxu0
    %v880 = vadd.f32 %v794, %v879
    %v881 = vpop.f32.mrf.mxu0
    %882 = vmatprep.mubr.f32.mxu0 0.0
    %883 = vmatmul.mubr.f32.gmra.mxu0 %v678
    %v884 = vpop.f32.mrf.mxu0
    %v885 = vadd.f32 %v794, %v884
    %v886 = vpop.f32.mrf.mxu0
    %887 = vmatprep.mubr.f32.mxu0 0.0
    %888 = vmatmul.mubr.f32.gmra.mxu0 %v796
    %v889 = vpop.f32.mrf.mxu0
    %v890 = vadd.f32 %v794, %v889
    %v891 = vpop.f32.mrf.mxu0
    %892 = vdwg.mxu0
    %v893 = vmax.f32 %v865, %v870
    %v894 = vmax.f32 %v893, %v875
    %v895 = vmax.f32 %v894, %v880
    %v896 = vmax.f32 %v895, %v885
    %v897 = vmax.f32 %v896, %v890
    %v898 = vsub.f32 %v865, %v897
    %v899 = vmul.f32 %v898, 1.442695
    %v900 = vpow.pop %v899
    %v901 = vsub.f32 %v870, %v897
    %v902 = vmul.f32 %v901, 1.442695
    %v903 = vpow.pop %v902
    %v904 = vsub.f32 %v875, %v897
    %v905 = vmul.f32 %v904, 1.442695
    %v906 = vpow.pop %v905
    %v907 = vsub.f32 %v880, %v897
    %v908 = vmul.f32 %v907, 1.442695
    %v909 = vpow.pop %v908
    %v910 = vsub.f32 %v885, %v897
    %v911 = vmul.f32 %v910, 1.442695
    %v912 = vpow.pop %v911
    %v913 = vsub.f32 %v890, %v897
    %v914 = vmul.f32 %v913, 1.442695
    %v915 = vpow.pop %v914
    %v916 = vadd.f32 %v900, %v903
    %v917 = vadd.f32 %v916, %v906
    %v918 = vadd.f32 %v917, %v909
    %v919 = vadd.f32 %v918, %v912
    %v920 = vadd.f32 %v919, %v915
    %v921 = vrcp.pop %v920
    %v922 = vmul.f32 1.0, %v921
    %v923 = vlaneseq
    %v924 = vand.u32 %v923, 127
    %vm925 = vcmp.eq.s32.totalorder %v924, 1
    %vm926 = vcmp.eq.s32.totalorder %v924, 3
    %vm927 = vmor %vm925, %vm926
    %vm928 = vcmp.ge.s32.totalorder %v924, 4
    %v929 = vmul.f32 %v900, %v922
    %v930 = vmul.f32 %v865, 0.5
    %v931 = vmul.f32 %v930, 1.442695
    %v932 = vpow.pop %v931
    %v933 = vsel %vm927, %v932, %v865
    %v934 = vsel %vm928, %v929, %v933
    %v935 = vmul.f32 %v903, %v922
    %v936 = vmul.f32 %v870, 0.5
    %v937 = vmul.f32 %v936, 1.442695
    %v938 = vpow.pop %v937
    %v939 = vsel %vm927, %v938, %v870
    %v940 = vsel %vm928, %v935, %v939
    %v941 = vmul.f32 %v906, %v922
    %v942 = vmul.f32 %v875, 0.5
    %v943 = vmul.f32 %v942, 1.442695
    %v944 = vpow.pop %v943
    %v945 = vsel %vm927, %v944, %v875
    %v946 = vsel %vm928, %v941, %v945
    %v947 = vmul.f32 %v909, %v922
    %v948 = vmul.f32 %v880, 0.5
    %v949 = vmul.f32 %v948, 1.442695
    %v950 = vpow.pop %v949
    %v951 = vsel %vm927, %v950, %v880
    %v952 = vsel %vm928, %v947, %v951
    %v953 = vmul.f32 %v912, %v922
    %v954 = vmul.f32 %v885, 0.5
    %v955 = vmul.f32 %v954, 1.442695
    %v956 = vpow.pop %v955
    %v957 = vsel %vm927, %v956, %v885
    %v958 = vsel %vm928, %v953, %v957
    %v959 = vmul.f32 %v915, %v922
    %v960 = vmul.f32 %v890, 0.5
    %v961 = vmul.f32 %v960, 1.442695
    %v962 = vpow.pop %v961
    %v963 = vsel %vm927, %v962, %v890
    %v964 = vsel %vm928, %v959, %v963
    %965 = vst [vmem:[%s8] sm:$0xff] %v934
    %966 = vst [vmem:[%s8 + $0x8] sm:$0xff] %v940
    %967 = vst [vmem:[%s8 + $0x10] sm:$0xff] %v946
    %968 = vst [vmem:[%s8 + $0x18] sm:$0xff] %v952
    %969 = vst [vmem:[%s8 + $0x20] sm:$0xff] %v958
    %970 = vst [vmem:[%s8 + $0x28] sm:$0xff] %v964
    // Predicated region
    $region34: #{sketch_decoder_forward.1} parent=1 // pred_check
      _
    $region35: #{sketch_decoder_forward.1} parent=1 // pred_check_branch
      %972 = sbr.rel (0) target = $region37
    $region36: #{sketch_decoder_forward.1} parent=1 // pred_region
      _
    $region37: #{sketch_decoder_forward.1} parent=1 // pred_fallthru
      _
    // Predicated region
    $region38: #{sketch_decoder_forward.1} parent=1 // pred_check
      _
    $region39: #{sketch_decoder_forward.1} parent=1 // pred_check_branch
      %974 = sbr.rel (0) target = $region41
    $region40: #{sketch_decoder_forward.1} parent=1 // pred_region
      %s976 = ssub.s32 128, 128
      %977 = vsyncadd [#allocation3], %s976
      %s979 = sshll.u32 [#allocation2], 4
      %s980 = int_to_ptr.vmem [resolvable:$true] %s979
      %982 = dma.vmem_to_hbm [thread:$0]  %s980, 128, %s9, [#allocation3]
    $region41: #{sketch_decoder_forward.1} parent=1 // pred_fallthru
      _
    // Predicated region
    $region42: #{sketch_decoder_forward.1} parent=1 // pred_check
      _
    $region43: #{sketch_decoder_forward.1} parent=1 // pred_check_branch
      %984 = sbr.rel (0) target = $region45
    $region44: #{sketch_decoder_forward.1} parent=1 // pred_region
      %s986 = ssub.s32 128, 128
      %987 = vsyncadd [#allocation5], %s986
      %s989 = sshll.u32 [#allocation4], 4
      %s990 = int_to_ptr.vmem [resolvable:$true] %s989
      %992 = dma.vmem_to_hbm [thread:$0]  %s990, 128, %s10, [#allocation5]
    $region45: #{sketch_decoder_forward.1} parent=1 // pred_fallthru
      _
    // Predicated region
    $region46: #{sketch_decoder_forward.1} parent=1 // pred_check
      _
    $region47: #{sketch_decoder_forward.1} parent=1 // pred_check_branch
      %994 = sbr.rel (0) target = $region49
    $region48: #{sketch_decoder_forward.1} parent=1 // pred_region
      _
    $region49: #{sketch_decoder_forward.1} parent=1 // pred_fallthru
      _
    // Predicated region
    $region50: #{sketch_decoder_forward.1} parent=1 // pred_check
      _
    $region51: #{sketch_decoder_forward.1} parent=1 // pred_check_branch
      %996 = sbr.rel (0) target = $region53
    $region52: #{sketch_decoder_forward.1} parent=1 // pred_region
      %997 = dma.done [#allocation3], 128
    $region53: #{sketch_decoder_forward.1} parent=1 // pred_fallthru
      _
    // Predicated region
    $region54: #{sketch_decoder_forward.1} parent=1 // pred_check
      _
    $region55: #{sketch_decoder_forward.1} parent=1 // pred_check_branch
      %999 = sbr.rel (0) target = $region57
    $region56: #{sketch_decoder_forward.1} parent=1 // pred_region
      %1000 = dma.done [#allocation5], 128
    $region57: #{sketch_decoder_forward.1} parent=1 // pred_fallthru
      _
    %1001 = vsyncpa [#allocation3], 1
    %1002 = vsyncpa [#allocation5], 1

</llo_original>
